<compile_context>
chip_gen: v7x
topology: tpu7x:2x2x1
jax: 0.10.0
libtpu: 0.0.40
codegen_flags: <defaults>
</compile_context>

<pallas_src>
import jax
import jax.numpy as jnp
from jax.experimental import pallas as pl
from jax.experimental.pallas import tpu as pltpu


def _round_up(n: int, m: int) -> int:
    return ((n + m - 1) // m) * m


def _snn_kernel(x_ref, w1_ref, w2_ref, thr_ref, v_ref):
    # x_ref  : (TB, D)    batch tile
    # w1_ref : (D, H)     VMEM-resident across the whole grid
    # w2_ref : (H, OUT)   VMEM-resident
    # thr_ref: (1, H)     per-hidden-unit IF threshold (runtime value)
    # v_ref  : (TB, OUT)  INoFire membrane potential
    x = x_ref[...]
    # Linear 1 (MXU)
    h1 = jnp.dot(x, w1_ref[...], preferred_element_type=jnp.float32)       # (TB, H)
    # IFNode heaviside spike
    s1 = (h1 >= thr_ref[...]).astype(jnp.float32)                          # (TB, H)
    # Linear 2 (MXU) -> INoFire integration (fresh state v = 0, so v == inter)
    v_ref[...] = jnp.dot(s1, w2_ref[...], preferred_element_type=jnp.float32)


def _snn_forward(x, w1, w2, thr_row, *, max_tile=2048):
    """x: (B, D) f32; w1: (D, H) f32; w2: (H, OUT) f32; thr_row: (1, H) f32."""
    B, D = x.shape
    H, OUT = w2.shape

    # Batch tile: multiple of 8 (sublane), large to amortize per-step overhead,
    # but keep >= 2 grid steps when B allows so both v7x TensorCores get work.
    TB = min(max_tile, _round_up(B, 8))
    if B > 8:
        TB = min(TB, max(8, _round_up(pl.cdiv(B, 2), 8)))
    grid = (pl.cdiv(B, TB),)

    v = pl.pallas_call(
        _snn_kernel,
        out_shape=jax.ShapeDtypeStruct((B, OUT), jnp.float32),
        grid=grid,
        in_specs=[
            pl.BlockSpec((TB, D), lambda i: (i, 0)),    # x: tiled along batch
            pl.BlockSpec((D, H), lambda i: (0, 0)),     # w1: resident
            pl.BlockSpec((H, OUT), lambda i: (0, 0)),   # w2: resident
            pl.BlockSpec((1, H), lambda i: (0, 0)),     # threshold row: resident
        ],
        out_specs=pl.BlockSpec((TB, OUT), lambda i: (i, 0)),
        compiler_params=pltpu.CompilerParams(
            # "parallel": no-op on single-TC v5e/v6e, shards grid on v7x.
            dimension_semantics=("parallel",),
            # NOTE: at these shapes the default scoped VMEM limit is ample on
            # v5e/v6e/v7x; set vmem_limit_bytes only if TB or D grow a lot.
        ),
        cost_estimate=pl.CostEstimate(
            flops=2 * B * D * H + 2 * B * H * OUT,
            transcendentals=0,
            bytes_accessed=4 * (B * D + D * H + H * OUT + H + B * OUT),
        ),
    )(x, w1, w2, thr_row)

    spike = jnp.zeros_like(v)   # INoFire forward output (identically zero)
    return spike, v


def individual_snn_no_fire(x, w1, w2, v_threshold, *, max_tile=2048):
    """Single ensemble member.  Returns (spike, v)."""
    H = w1.shape[1]
    thr_row = jnp.full((1, H), float(v_threshold), dtype=jnp.float32)
    return _snn_forward(x, w1, w2, thr_row, max_tile=max_tile)


def _block_diag(mats):
    rows = sum(m.shape[0] for m in mats)
    cols = sum(m.shape[1] for m in mats)
    out = jnp.zeros((rows, cols), mats[0].dtype)
    r = c = 0
    for m in mats:
        out = out.at[r:r + m.shape[0], c:c + m.shape[1]].set(m)
        r += m.shape[0]
        c += m.shape[1]
    return out


def ensemble_snn_no_fire(x, w1_list, w2_list, thresholds, *, max_tile=2048):
    """Fused 4-member ensemble: one pallas_call, x read from HBM once.

    w1_list[i]: (D, H_i), w2_list[i]: (H_i, OUT_i), thresholds[i]: python float.
    Returns (list of spike (B, OUT_i), list of v (B, OUT_i)).
    """
    w1_cat = jnp.concatenate(w1_list, axis=1)                     # (D, sum H)
    w2_blk = _block_diag(w2_list)                                 # (sum H, sum OUT)
    thr_row = jnp.concatenate(
        [jnp.full((1, w.shape[1]), float(t), dtype=jnp.float32)
         for w, t in zip(w1_list, thresholds)],
        axis=1)                                                   # (1, sum H)

    spike, v = _snn_forward(x, w1_cat, w2_blk, thr_row, max_tile=max_tile)

    spikes, vs, off = [], [], 0
    for w2 in w2_list:
        o = w2.shape[1]
        spikes.append(spike[:, off:off + o])
        vs.append(v[:, off:off + o])
        off += o
    return spikes, vs


def _reference(x, w1, w2, v_threshold):
    h1 = x @ w1
    s1 = (h1 >= v_threshold).astype(jnp.float32)
    inter = s1 @ w2
    return jnp.zeros_like(inter), inter


if __name__ == "__main__":
    # Small shapes consistent with the module: Linear(input_size, 40) -> IFNode -> Linear(40, 18)
    B, INPUT_SIZE, HIDDEN, OUT = 8, 16, 40, 18
    V_THRESHOLD = 0.25  # threshold[0]

    key = jax.random.PRNGKey(0)
    kx, k1, k2, ke = jax.random.split(key, 4)

    x = jax.random.normal(kx, (B, INPUT_SIZE), dtype=jnp.float32)
    # Deterministic init mimicking nn.Linear's U(-1/sqrt(fan_in), 1/sqrt(fan_in)), stored as (in, out)
    b1 = 1.0 / jnp.sqrt(float(INPUT_SIZE))
    b2 = 1.0 / jnp.sqrt(float(HIDDEN))
    w1 = jax.random.uniform(k1, (INPUT_SIZE, HIDDEN), jnp.float32, minval=-b1, maxval=b1)
    w2 = jax.random.uniform(k2, (HIDDEN, OUT), jnp.float32, minval=-b2, maxval=b2)

    # --- single member ---
    spike, v = individual_snn_no_fire(x, w1, w2, V_THRESHOLD)
    jax.block_until_ready((spike, v))
    ref_spike, ref_v = _reference(x, w1, w2, V_THRESHOLD)
    assert spike.shape == (B, OUT) and v.shape == (B, OUT)
    assert jnp.allclose(spike, ref_spike), "spike output mismatch"
    assert jnp.allclose(v, ref_v, atol=1e-5, rtol=1e-5), "membrane potential mismatch"

    # --- ragged batch (exercises the no-pad cdiv grid path) ---
    Br = 5
    spike_r, v_r = individual_snn_no_fire(x[:Br], w1, w2, V_THRESHOLD)
    jax.block_until_ready(v_r)
    _, ref_vr = _reference(x[:Br], w1, w2, V_THRESHOLD)
    assert jnp.allclose(v_r, ref_vr, atol=1e-5, rtol=1e-5), "ragged-batch mismatch"

    # --- fused 4-member ensemble (one pallas_call, x read once) ---
    thresholds = [0.25, 0.5, 0.75, 1.0]
    w1s, w2s = [], []
    k1e, k2e = jax.random.split(ke)
    for m in range(4):
        k1m = jax.random.fold_in(k1e, m)
        k2m = jax.random.fold_in(k2e, m)
        w1s.append(jax.random.uniform(k1m, (INPUT_SIZE, HIDDEN), jnp.float32, minval=-b1, maxval=b1))
        w2s.append(jax.random.uniform(k2m, (HIDDEN, OUT), jnp.float32, minval=-b2, maxval=b2))
    spikes_e, vs_e = ensemble_snn_no_fire(x, w1s, w2s, thresholds)
    jax.block_until_ready(vs_e)
    for m in range(4):
        _, ref_vm = _reference(x, w1s[m], w2s[m], thresholds[m])
        assert vs_e[m].shape == (B, OUT)
        assert jnp.allclose(vs_e[m], ref_vm, atol=1e-5, rtol=1e-5), f"ensemble member {m} mismatch"
        assert jnp.allclose(spikes_e[m], jnp.zeros_like(ref_vm)), f"ensemble spike {m} mismatch"

    print("KERNEL_OK")
</pallas_src>

<mosaic_0001>
module attributes {stable_mosaic.version = 11 : i64} {
  func.func @_snn_kernel(%arg0: i32, %arg1: memref<8x16xf32, #tpu.memory_space<vmem>>, %arg2: memref<16x40xf32, #tpu.memory_space<vmem>>, %arg3: memref<40x18xf32, #tpu.memory_space<vmem>>, %arg4: memref<1x40xf32, #tpu.memory_space<vmem>>, %arg5: memref<8x18xf32, #tpu.memory_space<vmem>>) attributes {dimension_semantics = [#tpu.dimension_semantics<parallel>], iteration_bounds = array<i64: 1>, scalar_prefetch = 0 : i64, scratch_operands = 0 : i64, tpu.core_type = #tpu.core_type<tc>, window_params = [{transform_indices = @transform_0, window_bounds = array<i64: 8, 16>}, {pipeline_mode = #tpu.pipeline_mode<synchronous>, transform_indices = @transform_1, window_bounds = array<i64: 16, 40>}, {pipeline_mode = #tpu.pipeline_mode<synchronous>, transform_indices = @transform_2, window_bounds = array<i64: 40, 18>}, {pipeline_mode = #tpu.pipeline_mode<synchronous>, transform_indices = @transform_3, window_bounds = array<i64: 1, 40>}, {transform_indices = @transform_4, window_bounds = array<i64: 8, 18>}]} {
    %c0 = arith.constant 0 : index
    %c0_0 = arith.constant 0 : index
    %0 = vector.load %arg1[%c0, %c0_0] : memref<8x16xf32, #tpu.memory_space<vmem>>, vector<8x16xf32>
    %c0_1 = arith.constant 0 : index
    %c0_2 = arith.constant 0 : index
    %1 = vector.load %arg2[%c0_1, %c0_2] : memref<16x40xf32, #tpu.memory_space<vmem>>, vector<16x40xf32>
    %cst = arith.constant dense<0.000000e+00> : vector<8x40xf32>
    %2 = tpu.matmul %0, %1, %cst {dimension_numbers = #tpu.dot_dimension_numbers<[1], [0], [0], [1], [0, 0, 1, 1], [], []>} : vector<8x16xf32>, vector<16x40xf32>, vector<8x40xf32> -> vector<8x40xf32>
    %c0_3 = arith.constant 0 : index
    %c0_4 = arith.constant 0 : index
    %3 = vector.load %arg4[%c0_3, %c0_4] : memref<1x40xf32, #tpu.memory_space<vmem>>, vector<1x40xf32>
    %4 = vector.broadcast %3 : vector<1x40xf32> to vector<8x40xf32>
    %5 = arith.cmpf oge, %2, %4 : vector<8x40xf32>
    %6 = arith.extui %5 : vector<8x40xi1> to vector<8x40xi32>
    %7 = arith.sitofp %6 : vector<8x40xi32> to vector<8x40xf32>
    %c0_5 = arith.constant 0 : index
    %c0_6 = arith.constant 0 : index
    %8 = vector.load %arg3[%c0_5, %c0_6] : memref<40x18xf32, #tpu.memory_space<vmem>>, vector<40x18xf32>
    %cst_7 = arith.constant dense<0.000000e+00> : vector<8x18xf32>
    %9 = tpu.matmul %7, %8, %cst_7 {dimension_numbers = #tpu.dot_dimension_numbers<[1], [0], [0], [1], [0, 0, 1, 1], [], []>} : vector<8x40xf32>, vector<40x18xf32>, vector<8x18xf32> -> vector<8x18xf32>
    %c0_8 = arith.constant 0 : index
    %c0_9 = arith.constant 0 : index
    %10 = vector.load %arg5[%c0_8, %c0_9] : memref<8x18xf32, #tpu.memory_space<vmem>>, vector<8x18xf32>
    tpu.vector_store %arg5[%c0_8, %c0_9], %9 {strides = array<i32>} : memref<8x18xf32, #tpu.memory_space<vmem>>, vector<8x18xf32>,
    return
  }
  func.func @transform_0(%arg0: i32) -> (i32, i32) {
    %c0_i32 = arith.constant 0 : i32
    %c0_i32_0 = arith.constant 0 : i32
    return %arg0, %c0_i32 : i32, i32
  }
  func.func @transform_1(%arg0: i32) -> (i32, i32) {
    %c0_i32 = arith.constant 0 : i32
    %c0_i32_0 = arith.constant 0 : i32
    %c0_i32_1 = arith.constant 0 : i32
    return %c0_i32, %c0_i32_0 : i32, i32
  }
  func.func @transform_2(%arg0: i32) -> (i32, i32) {
    %c0_i32 = arith.constant 0 : i32
    %c0_i32_0 = arith.constant 0 : i32
    %c0_i32_1 = arith.constant 0 : i32
    return %c0_i32, %c0_i32_0 : i32, i32
  }
  func.func @transform_3(%arg0: i32) -> (i32, i32) {
    %c0_i32 = arith.constant 0 : i32
    %c0_i32_0 = arith.constant 0 : i32
    %c0_i32_1 = arith.constant 0 : i32
    return %c0_i32, %c0_i32_0 : i32, i32
  }
  func.func @transform_4(%arg0: i32) -> (i32, i32) {
    %c0_i32 = arith.constant 0 : i32
    %c0_i32_0 = arith.constant 0 : i32
    return %arg0, %c0_i32 : i32, i32
  }
}

</mosaic_0001>

<llo_original>
// kernel: tpu_custom_call.1
$region0: #{tpu_custom_call.1}
  #allocation0 [shape = 'u32[]', space=smem, size = 0x4, offset = 0x4, fixed_abs, tag = 'smem constant byte address 0x4 - core index']
  #allocation1 [shape = 'u32[144,128]{1,0:T(1,128)}', space=vmem, size = 0x12000, scoped, tag = 'internal scratch']
  %s0 = inlined_call_operand.vmem [shape: f32[8,16], index: 0, kind: input, shape index: {}]
  %s1 = inlined_call_operand.vmem [shape: f32[16,40], index: 1, kind: input, shape index: {}]
  %s2 = inlined_call_operand.vmem [shape: f32[40,18], index: 2, kind: input, shape index: {}]
  %s3 = inlined_call_operand.vmem [shape: f32[1,40], index: 3, kind: input, shape index: {}]
  %s4 = inlined_call_operand.hbm [shape: f32[8,18], index: 4, kind: output, shape index: {}]
  %s5 = sld [smem:[#allocation0]]
  $region26: #{tpu_custom_call.1} parent=0
    _
  %s7 = ssub.s32 1, %s5
  %s8 = scalar_select 0, %s7, %s5
  $region1: #{tpu_custom_call.1} parent=0
    #allocation2 [shape = 'u8[4096]{0}', space=vmem, size = 0x1000, scoped, tag = 'output window, operand 0, single buffered']
    #allocation3 [shape = 's32[1]{0}', space=sflag, size = 0x4, scoped, tag = 'scoped memory for tpu_custom_call.1']
    %9 = vsyncpa [#allocation3], 0
    // Predicated region
    $region2: #{tpu_custom_call.1} parent=1 // pred_check
      _
    $region3: #{tpu_custom_call.1} parent=1 // pred_check_branch
      %11 = sbr.rel (0) target = $region5
    $region4: #{tpu_custom_call.1} parent=1 // pred_region
      _
    $region5: #{tpu_custom_call.1} parent=1 // pred_fallthru
      _
    // Predicated region
    $region6: #{tpu_custom_call.1} parent=1 // pred_check
      _
    $region7: #{tpu_custom_call.1} parent=1 // pred_check_branch
      %13 = sbr.rel (0) target = $region9
    $region8: #{tpu_custom_call.1} parent=1 // pred_region
      _
    $region9: #{tpu_custom_call.1} parent=1 // pred_fallthru
      _
    // Predicated region
    $region10: #{tpu_custom_call.1} parent=1 // pred_check
      _
    $region11: #{tpu_custom_call.1} parent=1 // pred_check_branch
      %15 = sbr.rel (0) target = $region13
    $region12: #{tpu_custom_call.1} parent=1 // pred_region
      _
    $region13: #{tpu_custom_call.1} parent=1 // pred_fallthru
      _
    // Predicated region
    $region14: #{tpu_custom_call.1} parent=1 // pred_check
      _
    $region15: #{tpu_custom_call.1} parent=1 // pred_check_branch
      %17 = sbr.rel (0) target = $region17
    $region16: #{tpu_custom_call.1} parent=1 // pred_region
      _
    $region17: #{tpu_custom_call.1} parent=1 // pred_fallthru
      _
    %v18 = vld [vmem:[%s0] sm:$0xff]
    %v19 = vld [vmem:[%s1] sm:$0xff]
    %v20 = vld [vmem:[%s1 + $0x8] sm:$0xff]
    %vm21 = vcmask 130048
    %v23 = vsel %vm21, %v18, 0
    %25 = vmatprep.subr.mxu0 0.0
    %26 = vmatpush1.msra.mxu0 %v19
    %27 = vmatprep.subr.mxu0 0.0
    %28 = vmatpush1.msra.mxu0 %v20
    %29 = vmatprep.subr.mxu0 0.0
    %30 = vmatpush1.msra.mxu0 0.0
    %31 = vmatprep.subr.mxu0 0.0
    %32 = vmatpush1.msra.mxu0 0.0
    %33 = vmatprep.subr.mxu0 0.0
    %34 = vmatpush1.msra.mxu0 0.0
    %35 = vmatprep.subr.mxu0 0.0
    %36 = vmatpush1.msra.mxu0 0.0
    %37 = vmatprep.subr.mxu0 0.0
    %38 = vmatpush1.msra.mxu0 0.0
    %39 = vmatprep.subr.mxu0 0.0
    %40 = vmatpush1.msra.mxu0 0.0
    %41 = vmatprep.subr.mxu0 0.0
    %42 = vmatpush1.msra.mxu0 0.0
    %43 = vmatprep.subr.mxu0 0.0
    %44 = vmatpush1.msra.mxu0 0.0
    %45 = vmatprep.subr.mxu0 0.0
    %46 = vmatpush1.msra.mxu0 0.0
    %47 = vmatprep.subr.mxu0 0.0
    %48 = vmatpush1.msra.mxu0 0.0
    %49 = vmatprep.subr.mxu0 0.0
    %50 = vmatpush1.msra.mxu0 0.0
    %51 = vmatprep.subr.mxu0 0.0
    %52 = vmatpush1.msra.mxu0 0.0
    %53 = vmatprep.subr.mxu0 0.0
    %54 = vmatpush1.msra.mxu0 0.0
    %55 = vmatprep.subr.mxu0 0.0
    %56 = vmatpush1.msra.mxu0 0.0
    %57 = vmatprep.subr.mxu0 0.0
    %58 = vmatpush1.msra.mxu0 0.0
    %59 = vmatprep.subr.mxu0 0.0
    %60 = vmatpush1.msra.mxu0 0.0
    %61 = vmatprep.subr.mxu0 0.0
    %62 = vmatpush1.msra.mxu0 0.0
    %63 = vmatprep.subr.mxu0 0.0
    %64 = vmatpush1.msra.mxu0 0.0
    %65 = vmatprep.subr.mxu0 0.0
    %66 = vmatpush1.msra.mxu0 0.0
    %67 = vmatprep.subr.mxu0 0.0
    %68 = vmatpush1.msra.mxu0 0.0
    %69 = vmatprep.subr.mxu0 0.0
    %70 = vmatpush1.msra.mxu0 0.0
    %71 = vmatprep.subr.mxu0 0.0
    %72 = vmatpush1.msra.mxu0 0.0
    %73 = vmatprep.subr.mxu0 0.0
    %74 = vmatpush1.msra.mxu0 0.0
    %75 = vmatprep.subr.mxu0 0.0
    %76 = vmatpush1.msra.mxu0 0.0
    %77 = vmatprep.subr.mxu0 0.0
    %78 = vmatpush1.msra.mxu0 0.0
    %79 = vmatprep.subr.mxu0 0.0
    %80 = vmatpush1.msra.mxu0 0.0
    %81 = vmatprep.subr.mxu0 0.0
    %82 = vmatpush1.msra.mxu0 0.0
    %83 = vmatprep.subr.mxu0 0.0
    %84 = vmatpush1.msra.mxu0 0.0
    %85 = vmatprep.subr.mxu0 0.0
    %86 = vmatpush1.msra.mxu0 0.0
    %87 = vmatprep.subr.mxu0 0.0
    %88 = vmatpush1.msra.mxu0 0.0
    %89 = vmatprep.mubr.f32.mxu0 0.0
    %90 = vmatmul.mubr.f32.gmra.mrb[0].mxu0 %v23
    %v91 = vpop.f32.mrb[0].mxu0
    %v92 = vadd.f32 0.0, %v91
    %v93 = vpop.f32.mrb[0].mxu0
    %94 = vdwg.mxu0
    %v95 = vld [vmem:[%s3] sm:$0x1]
    %v97 = vlaneseq
    %v98 = vshrl.u32 %v97, 7
    %v99 = vsub.s32 0, %v98
    %v100 = vrot.slane %v95, %v99
    %vm102 = vcmp.ge.f32.partialorder %v92, %v100
    %v103 = vsel %vm102, 1, 0
    %v104 = vcvt.s32.f32 %v103
    %v105 = vld [vmem:[%s2] sm:$0xff]
    %v106 = vld [vmem:[%s2 + $0x8] sm:$0xff]
    %v107 = vld [vmem:[%s2 + $0x10] sm:$0xff]
    %v108 = vld [vmem:[%s2 + $0x18] sm:$0xff]
    %v109 = vld [vmem:[%s2 + $0x20] sm:$0xff]
    %vm110 = vcmask 326656
    %v112 = vsel %vm110, %v104, 0
    %114 = vmatprep.subr.mxu0 0.0
    %115 = vmatpush1.msra.mxu0 %v105
    %116 = vmatprep.subr.mxu0 0.0
    %117 = vmatpush1.msra.mxu0 %v106
    %118 = vmatprep.subr.mxu0 0.0
    %119 = vmatpush1.msra.mxu0 %v107
    %120 = vmatprep.subr.mxu0 0.0
    %121 = vmatpush1.msra.mxu0 %v108
    %122 = vmatprep.subr.mxu0 0.0
    %123 = vmatpush1.msra.mxu0 %v109
    %124 = vmatprep.subr.mxu0 0.0
    %125 = vmatpush1.msra.mxu0 0.0
    %126 = vmatprep.subr.mxu0 0.0
    %127 = vmatpush1.msra.mxu0 0.0
    %128 = vmatprep.subr.mxu0 0.0
    %129 = vmatpush1.msra.mxu0 0.0
    %130 = vmatprep.subr.mxu0 0.0
    %131 = vmatpush1.msra.mxu0 0.0
    %132 = vmatprep.subr.mxu0 0.0
    %133 = vmatpush1.msra.mxu0 0.0
    %134 = vmatprep.subr.mxu0 0.0
    %135 = vmatpush1.msra.mxu0 0.0
    %136 = vmatprep.subr.mxu0 0.0
    %137 = vmatpush1.msra.mxu0 0.0
    %138 = vmatprep.subr.mxu0 0.0
    %139 = vmatpush1.msra.mxu0 0.0
    %140 = vmatprep.subr.mxu0 0.0
    %141 = vmatpush1.msra.mxu0 0.0
    %142 = vmatprep.subr.mxu0 0.0
    %143 = vmatpush1.msra.mxu0 0.0
    %144 = vmatprep.subr.mxu0 0.0
    %145 = vmatpush1.msra.mxu0 0.0
    %146 = vmatprep.subr.mxu0 0.0
    %147 = vmatpush1.msra.mxu0 0.0
    %148 = vmatprep.subr.mxu0 0.0
    %149 = vmatpush1.msra.mxu0 0.0
    %150 = vmatprep.subr.mxu0 0.0
    %151 = vmatpush1.msra.mxu0 0.0
    %152 = vmatprep.subr.mxu0 0.0
    %153 = vmatpush1.msra.mxu0 0.0
    %154 = vmatprep.subr.mxu0 0.0
    %155 = vmatpush1.msra.mxu0 0.0
    %156 = vmatprep.subr.mxu0 0.0
    %157 = vmatpush1.msra.mxu0 0.0
    %158 = vmatprep.subr.mxu0 0.0
    %159 = vmatpush1.msra.mxu0 0.0
    %160 = vmatprep.subr.mxu0 0.0
    %161 = vmatpush1.msra.mxu0 0.0
    %162 = vmatprep.subr.mxu0 0.0
    %163 = vmatpush1.msra.mxu0 0.0
    %164 = vmatprep.subr.mxu0 0.0
    %165 = vmatpush1.msra.mxu0 0.0
    %166 = vmatprep.subr.mxu0 0.0
    %167 = vmatpush1.msra.mxu0 0.0
    %168 = vmatprep.subr.mxu0 0.0
    %169 = vmatpush1.msra.mxu0 0.0
    %170 = vmatprep.subr.mxu0 0.0
    %171 = vmatpush1.msra.mxu0 0.0
    %172 = vmatprep.subr.mxu0 0.0
    %173 = vmatpush1.msra.mxu0 0.0
    %174 = vmatprep.subr.mxu0 0.0
    %175 = vmatpush1.msra.mxu0 0.0
    %176 = vmatprep.subr.mxu0 0.0
    %177 = vmatpush1.msra.mxu0 0.0
    %178 = vmatprep.mubr.f32.mxu0 0.0
    %179 = vmatmul.mubr.f32.gmra.mrb[0].mxu0 %v112
    %v180 = vpop.f32.mrb[0].mxu0
    %v181 = vadd.f32 0.0, %v180
    %v182 = vpop.f32.mrb[0].mxu0
    %183 = vdwg.mxu0
    %vm184 = vcmask 146432
    %185 = vst.msk [vmem:[#allocation2] sm:$0xff] %vm184, %v181
    // Predicated region
    $region18: #{tpu_custom_call.1} parent=1 // pred_check
      _
    $region19: #{tpu_custom_call.1} parent=1 // pred_check_branch
      %187 = sbr.rel (0) target = $region21
    $region20: #{tpu_custom_call.1} parent=1 // pred_region
      %s189 = ssub.s32 128, 128
      %190 = vsyncadd [#allocation3], %s189
      %s192 = sshll.u32 [#allocation2], 4
      %s193 = int_to_ptr.vmem [resolvable:$true] %s192
      %195 = dma.vmem_to_hbm [thread:$0]  %s193, 128, %s4, [#allocation3]
    $region21: #{tpu_custom_call.1} parent=1 // pred_fallthru
      _
    // Predicated region
    $region22: #{tpu_custom_call.1} parent=1 // pred_check
      _
    $region23: #{tpu_custom_call.1} parent=1 // pred_check_branch
      %197 = sbr.rel (0) target = $region25
    $region24: #{tpu_custom_call.1} parent=1 // pred_region
      %198 = dma.done [#allocation3], 128
    $region25: #{tpu_custom_call.1} parent=1 // pred_fallthru
      _
    %199 = vsyncpa [#allocation3], 1

</llo_original>
